<compile_context>
chip_gen: v7x
topology: tpu7x:2x2x1
jax: 0.10.0
libtpu: 0.0.40
codegen_flags: <defaults>
</compile_context>

<pallas_src>
import functools

import jax
import jax.numpy as jnp
from jax.experimental import pallas as pl
from jax.experimental.pallas import tpu as pltpu

LARGE_NUM = 1000000000.0
LN_EPS = 1e-5        # torch.nn.LayerNorm default
NORM_EPS = 1e-12     # torch.nn.functional.normalize default


# ----------------------------------------------------------------------------
# Kernel 1: fused predictor (Linear -> LayerNorm -> ReLU -> Linear) + L2-norm
# ----------------------------------------------------------------------------
def _predictor_kernel(x_ref, w1_ref, b1_ref, gamma_ref, beta_ref, w2_ref,
                      b2_ref, out_ref, *, matmul_dtype):
    # MXU operands in `matmul_dtype` (bf16 on v6e/v7x), f32 accumulation; all
    # statistics (LayerNorm, L2 norm) stay in f32 (v5e has no bf16 VPU/EUP).
    x = x_ref[...].astype(matmul_dtype)
    w1 = w1_ref[...].astype(matmul_dtype)
    h = jnp.dot(x, w1, preferred_element_type=jnp.float32) + b1_ref[...]

    # LayerNorm over the hidden (lane) dim.
    mean = jnp.mean(h, axis=-1, keepdims=True)
    c = h - mean
    var = jnp.mean(c * c, axis=-1, keepdims=True)
    h = c * jax.lax.rsqrt(var + LN_EPS) * gamma_ref[...] + beta_ref[...]
    h = jnp.maximum(h, 0.0)                                    # ReLU

    w2 = w2_ref[...].astype(matmul_dtype)
    y = jnp.dot(h.astype(matmul_dtype), w2,
                preferred_element_type=jnp.float32) + b2_ref[...]

    # F.normalize(p=2, dim=-1, eps=1e-12):  y / max(||y||, eps)  (EUP rsqrt)
    ss = jnp.sum(y * y, axis=-1, keepdims=True)
    inv_norm = jax.lax.rsqrt(jnp.maximum(ss, NORM_EPS * NORM_EPS))
    out_ref[...] = (y * inv_norm).astype(out_ref.dtype)


def predictor_normalize(x, params, *, matmul_dtype=jnp.float32, block_rows=128):
    """One pass of the MLP1 predictor + L2 normalization, tiled over batch rows."""
    B, D = x.shape
    tm = min(block_rows, B)
    assert B % tm == 0, "batch must be divisible by the row tile"
    w1, b1, gamma, beta, w2, b2 = params
    pinned = lambda i: (0, 0)   # weights stay resident across row tiles
    kernel = functools.partial(_predictor_kernel, matmul_dtype=matmul_dtype)
    return pl.pallas_call(
        kernel,
        out_shape=jax.ShapeDtypeStruct((B, D), matmul_dtype),
        grid=(B // tm,),
        in_specs=[pl.BlockSpec((tm, D), lambda i: (i, 0)),
                  pl.BlockSpec((D, D), pinned),
                  pl.BlockSpec((1, D), pinned),
                  pl.BlockSpec((1, D), pinned),
                  pl.BlockSpec((1, D), pinned),
                  pl.BlockSpec((D, D), pinned),
                  pl.BlockSpec((1, D), pinned)],
        out_specs=pl.BlockSpec((tm, D), lambda i: (i, 0)),
        compiler_params=pltpu.CompilerParams(
            dimension_semantics=("parallel",)),
    )(x, w1, b1, gamma, beta, w2, b2)


# ----------------------------------------------------------------------------
# Kernel 2: NT-Xent with identical views.  Per-row loss via online LSE.
#
# With h1 == h2 == h (already L2-normalized), G = h @ h^T / T and
#   loss = 2 * mean_i [ logsumexp_j(cat[G_i, G_i - LARGE*eye_i]) - G_ii ]
#        = 2 * mean_i [ log( 2*sum_j exp(G_ij) - exp(G_ii) ) - G_ii ]
# (the masked diagonal exp(G_ii - LARGE) underflows to exactly 0 in f32).
# ----------------------------------------------------------------------------
def _contrastive_kernel(hr_ref, hc_ref, out_ref, m_ref, s_ref, pos_ref, *,
                        inv_t):
    i = pl.program_id(0)                    # row tile   ('parallel')
    j = pl.program_id(1)                    # col tile   ('arbitrary', innermost)

    @pl.when(j == 0)
    def _init():
        m_ref[...] = jnp.full(m_ref.shape, -jnp.inf, m_ref.dtype)
        s_ref[...] = jnp.zeros(s_ref.shape, s_ref.dtype)
        pos_ref[...] = jnp.zeros(pos_ref.shape, pos_ref.dtype)

    # Gram block, contracting the LAST dims of both tiles (no transpose).
    g = jax.lax.dot_general(hr_ref[...], hc_ref[...],
                            dimension_numbers=(((1,), (1,)), ((), ())),
                            preferred_element_type=jnp.float32) * inv_t

    # Online (streaming) log-sum-exp over column tiles.
    m_prev = m_ref[...]
    m_new = jnp.maximum(m_prev, jnp.max(g, axis=-1, keepdims=True))
    alpha = jnp.exp(m_prev - m_new)
    s_ref[...] = (alpha * s_ref[...]
                  + 2.0 * jnp.sum(jnp.exp(g - m_new), axis=-1, keepdims=True))
    m_ref[...] = m_new

    # Diagonal handling only on the diagonal block: remove one copy of
    # exp(G_ii) (the masked 'aa' diagonal contributes ~0) and record the
    # positive logit G_ii.
    @pl.when(i == j)
    def _diag():
        rr = jax.lax.broadcasted_iota(jnp.int32, g.shape, 0)
        cc = jax.lax.broadcasted_iota(jnp.int32, g.shape, 1)
        diag = jnp.sum(jnp.where(rr == cc, g, 0.0), axis=-1, keepdims=True)
        pos_ref[...] = diag
        s_ref[...] = s_ref[...] - jnp.exp(diag - m_new)

    @pl.when(j == pl.num_programs(1) - 1)
    def _finalize():
        out_ref[...] = m_ref[...] + jnp.log(s_ref[...]) - pos_ref[...]


def contrastive_row_loss(h, *, temperature=1.0, block_rows=128):
    """Per-row  logsumexp(cat[ab, aa]) - ab_ii  for identical views."""
    B, D = h.shape
    t = min(block_rows, B)
    assert B % t == 0, "batch must be divisible by the tile size"
    kernel = functools.partial(_contrastive_kernel, inv_t=1.0 / temperature)
    return pl.pallas_call(
        kernel,
        out_shape=jax.ShapeDtypeStruct((B, 1), jnp.float32),
        grid=(B // t, B // t),
        in_specs=[pl.BlockSpec((t, D), lambda i, j: (i, 0)),   # row tile of h
                  pl.BlockSpec((t, D), lambda i, j: (j, 0))],  # col tile of h
        out_specs=pl.BlockSpec((t, 1), lambda i, j: (i, 0)),
        scratch_shapes=[pltpu.VMEM((t, 1), jnp.float32),   # running max m
                        pltpu.VMEM((t, 1), jnp.float32),   # running sum s
                        pltpu.VMEM((t, 1), jnp.float32)],  # positive logit
        compiler_params=pltpu.CompilerParams(
            dimension_semantics=("parallel", "arbitrary")),
    )(h, h)


# ----------------------------------------------------------------------------
# SimCLRLoss forward (glue in plain JAX)
# ----------------------------------------------------------------------------
def simclr_loss_forward(rep_a, params, *, temperature=1.0,
                        matmul_dtype=jnp.float32):
    # data_augmentation_strategy == 'normal'  =>  view1 == view2, so the
    # predictor runs once and the contrastive loss reduces to 2x one CE term.
    h = predictor_normalize(rep_a, params, matmul_dtype=matmul_dtype)
    per_row = contrastive_row_loss(h, temperature=temperature)
    return 2.0 * jnp.mean(per_row)   # tiny (B,1) reduction in plain JAX


# ----------------------------------------------------------------------------
# Pure-JAX reference (faithful to the PyTorch forward) for sanity checking
# ----------------------------------------------------------------------------
def _reference(rep_a, params, temperature=1.0):
    w1, b1, g, beta, w2, b2 = params
    with jax.default_matmul_precision("highest"):
        def pred(x):
            h = x @ w1 + b1
            mu = jnp.mean(h, -1, keepdims=True)
            var = jnp.mean((h - mu) ** 2, -1, keepdims=True)
            h = (h - mu) / jnp.sqrt(var + LN_EPS) * g + beta
            h = jnp.maximum(h, 0.0)
            return h @ w2 + b2

        h1 = pred(rep_a)
        h2 = pred(rep_a)
        h1 = h1 / jnp.maximum(jnp.linalg.norm(h1, axis=-1, keepdims=True), NORM_EPS)
        h2 = h2 / jnp.maximum(jnp.linalg.norm(h2, axis=-1, keepdims=True), NORM_EPS)
        B = h1.shape[0]
        eye = jnp.eye(B, dtype=jnp.float32)
        aa = h1 @ h1.T / temperature - eye * LARGE_NUM
        bb = h2 @ h2.T / temperature - eye * LARGE_NUM
        ab = h1 @ h2.T / temperature
        ba = h2 @ h1.T / temperature

        def ce(pos, neg):
            cat = jnp.concatenate([pos, neg], axis=1)
            lse = jax.scipy.special.logsumexp(cat, axis=-1)
            return jnp.mean(lse - jnp.diagonal(pos))

        return ce(ab, aa) + ce(ba, bb)


if __name__ == "__main__":
    key = jax.random.PRNGKey(0)
    # Small but lane-dense shapes: hidden dim = 128 (one full lane tile),
    # batch = 256 so the contrastive grid is 2x2 row/col tiles of 128.
    B, D = 256, 128

    k_x, k_w1, k_b1, k_w2, k_b2 = jax.random.split(key, 5)

    # Sentence embeddings produced by the (out-of-scope) encoder.
    rep_a = jax.random.normal(k_x, (B, D), dtype=jnp.float32)

    # Deterministic predictor (MLP1) parameters; weights stored as (in, out).
    scale = 1.0 / jnp.sqrt(jnp.float32(D))
    w1 = jax.random.uniform(k_w1, (D, D), jnp.float32, -scale, scale)
    b1 = jax.random.uniform(k_b1, (1, D), jnp.float32, -scale, scale)
    gamma = jnp.ones((1, D), jnp.float32)   # LayerNorm weight
    beta = jnp.zeros((1, D), jnp.float32)   # LayerNorm bias
    w2 = jax.random.uniform(k_w2, (D, D), jnp.float32, -scale, scale)
    b2 = jax.random.uniform(k_b2, (1, D), jnp.float32, -scale, scale)

    params = (w1, b1, gamma, beta, w2, b2)

    # f32 MXU operands: bit-accurate parity with the reference.
    loss_f32 = simclr_loss_forward(rep_a, params, temperature=1.0,
                                   matmul_dtype=jnp.float32)
    # bf16 MXU operands (v6e/v7x fast path), f32 accumulation/statistics.
    loss_bf16 = simclr_loss_forward(rep_a, params, temperature=1.0,
                                    matmul_dtype=jnp.bfloat16)
    jax.block_until_ready((loss_f32, loss_bf16))

    ref = _reference(rep_a, params, temperature=1.0)
    assert jnp.allclose(loss_f32, ref, rtol=2e-3, atol=2e-3), (loss_f32, ref)
    assert jnp.allclose(loss_bf16, ref, rtol=5e-2, atol=5e-2), (loss_bf16, ref)

    print("KERNEL_OK")
</pallas_src>

<mosaic_0001>
module attributes {stable_mosaic.version = 11 : i64} {
  func.func @_predictor_kernel(%arg0: i32, %arg1: memref<128x128xf32, #tpu.memory_space<vmem>>, %arg2: memref<128x128xf32, #tpu.memory_space<vmem>>, %arg3: memref<1x128xf32, #tpu.memory_space<vmem>>, %arg4: memref<1x128xf32, #tpu.memory_space<vmem>>, %arg5: memref<1x128xf32, #tpu.memory_space<vmem>>, %arg6: memref<128x128xf32, #tpu.memory_space<vmem>>, %arg7: memref<1x128xf32, #tpu.memory_space<vmem>>, %arg8: memref<128x128xf32, #tpu.memory_space<vmem>>) attributes {dimension_semantics = [#tpu.dimension_semantics<parallel>], iteration_bounds = array<i64: 2>, scalar_prefetch = 0 : i64, scratch_operands = 0 : i64, tpu.core_type = #tpu.core_type<tc>, window_params = [{transform_indices = @transform_0, window_bounds = array<i64: 128, 128>}, {pipeline_mode = #tpu.pipeline_mode<synchronous>, transform_indices = @transform_1, window_bounds = array<i64: 128, 128>}, {pipeline_mode = #tpu.pipeline_mode<synchronous>, transform_indices = @transform_2, window_bounds = array<i64: 1, 128>}, {pipeline_mode = #tpu.pipeline_mode<synchronous>, transform_indices = @transform_3, window_bounds = array<i64: 1, 128>}, {pipeline_mode = #tpu.pipeline_mode<synchronous>, transform_indices = @transform_4, window_bounds = array<i64: 1, 128>}, {pipeline_mode = #tpu.pipeline_mode<synchronous>, transform_indices = @transform_5, window_bounds = array<i64: 128, 128>}, {pipeline_mode = #tpu.pipeline_mode<synchronous>, transform_indices = @transform_6, window_bounds = array<i64: 1, 128>}, {transform_indices = @transform_7, window_bounds = array<i64: 128, 128>}]} {
    %c0 = arith.constant 0 : index
    %c0_0 = arith.constant 0 : index
    %0 = vector.load %arg1[%c0, %c0_0] : memref<128x128xf32, #tpu.memory_space<vmem>>, vector<128x128xf32>
    %c0_1 = arith.constant 0 : index
    %c0_2 = arith.constant 0 : index
    %1 = vector.load %arg2[%c0_1, %c0_2] : memref<128x128xf32, #tpu.memory_space<vmem>>, vector<128x128xf32>
    %cst = arith.constant dense<0.000000e+00> : vector<128x128xf32>
    %2 = tpu.matmul %0, %1, %cst {dimension_numbers = #tpu.dot_dimension_numbers<[1], [0], [0], [1], [0, 0, 1, 1], [], []>} : vector<128x128xf32>, vector<128x128xf32>, vector<128x128xf32> -> vector<128x128xf32>
    %c0_3 = arith.constant 0 : index
    %c0_4 = arith.constant 0 : index
    %3 = vector.load %arg3[%c0_3, %c0_4] : memref<1x128xf32, #tpu.memory_space<vmem>>, vector<1x128xf32>
    %4 = vector.broadcast %3 : vector<1x128xf32> to vector<128x128xf32>
    %5 = arith.addf %2, %4 : vector<128x128xf32>
    %cst_5 = arith.constant dense<0.000000e+00> : vector<128xf32>
    %6 = vector.multi_reduction <add>, %5, %cst_5 [1] : vector<128x128xf32> to vector<128xf32>
    %7 = vector.shape_cast %6 : vector<128xf32> to vector<128x1xf32>
    %cst_6 = arith.constant 1.280000e+02 : f32
    %8 = vector.broadcast %cst_6 : f32 to vector<128x1xf32>
    %9 = arith.divf %7, %8 : vector<128x1xf32>
    %10 = vector.broadcast %9 : vector<128x1xf32> to vector<128x128xf32>
    %11 = arith.subf %5, %10 : vector<128x128xf32>
    %12 = arith.mulf %11, %11 : vector<128x128xf32>
    %cst_7 = arith.constant dense<0.000000e+00> : vector<128xf32>
    %13 = vector.multi_reduction <add>, %12, %cst_7 [1] : vector<128x128xf32> to vector<128xf32>
    %14 = vector.shape_cast %13 : vector<128xf32> to vector<128x1xf32>
    %cst_8 = arith.constant 1.280000e+02 : f32
    %15 = vector.broadcast %cst_8 : f32 to vector<128x1xf32>
    %16 = arith.divf %14, %15 : vector<128x1xf32>
    %cst_9 = arith.constant 9.99999974E-6 : f32
    %17 = vector.broadcast %cst_9 : f32 to vector<128x1xf32>
    %18 = arith.addf %16, %17 : vector<128x1xf32>
    %19 = math.rsqrt %18 : vector<128x1xf32>
    %20 = vector.broadcast %19 : vector<128x1xf32> to vector<128x128xf32>
    %21 = arith.mulf %11, %20 : vector<128x128xf32>
    %c0_10 = arith.constant 0 : index
    %c0_11 = arith.constant 0 : index
    %22 = vector.load %arg4[%c0_10, %c0_11] : memref<1x128xf32, #tpu.memory_space<vmem>>, vector<1x128xf32>
    %23 = vector.broadcast %22 : vector<1x128xf32> to vector<128x128xf32>
    %24 = arith.mulf %21, %23 : vector<128x128xf32>
    %c0_12 = arith.constant 0 : index
    %c0_13 = arith.constant 0 : index
    %25 = vector.load %arg5[%c0_12, %c0_13] : memref<1x128xf32, #tpu.memory_space<vmem>>, vector<1x128xf32>
    %26 = vector.broadcast %25 : vector<1x128xf32> to vector<128x128xf32>
    %27 = arith.addf %24, %26 : vector<128x128xf32>
    %cst_14 = arith.constant 0.000000e+00 : f32
    %28 = vector.broadcast %cst_14 : f32 to vector<128x128xf32>
    %29 = arith.maximumf %27, %28 : vector<128x128xf32>
    %c0_15 = arith.constant 0 : index
    %c0_16 = arith.constant 0 : index
    %30 = vector.load %arg6[%c0_15, %c0_16] : memref<128x128xf32, #tpu.memory_space<vmem>>, vector<128x128xf32>
    %cst_17 = arith.constant dense<0.000000e+00> : vector<128x128xf32>
    %31 = tpu.matmul %29, %30, %cst_17 {dimension_numbers = #tpu.dot_dimension_numbers<[1], [0], [0], [1], [0, 0, 1, 1], [], []>} : vector<128x128xf32>, vector<128x128xf32>, vector<128x128xf32> -> vector<128x128xf32>
    %c0_18 = arith.constant 0 : index
    %c0_19 = arith.constant 0 : index
    %32 = vector.load %arg7[%c0_18, %c0_19] : memref<1x128xf32, #tpu.memory_space<vmem>>, vector<1x128xf32>
    %33 = vector.broadcast %32 : vector<1x128xf32> to vector<128x128xf32>
    %34 = arith.addf %31, %33 : vector<128x128xf32>
    %35 = arith.mulf %34, %34 : vector<128x128xf32>
    %cst_20 = arith.constant dense<0.000000e+00> : vector<128xf32>
    %36 = vector.multi_reduction <add>, %35, %cst_20 [1] : vector<128x128xf32> to vector<128xf32>
    %37 = vector.shape_cast %36 : vector<128xf32> to vector<128x1xf32>
    %cst_21 = arith.constant 1.000000e-24 : f32
    %38 = vector.broadcast %cst_21 : f32 to vector<128x1xf32>
    %39 = arith.maximumf %37, %38 : vector<128x1xf32>
    %40 = math.rsqrt %39 : vector<128x1xf32>
    %41 = vector.broadcast %40 : vector<128x1xf32> to vector<128x128xf32>
    %42 = arith.mulf %34, %41 : vector<128x128xf32>
    %c0_22 = arith.constant 0 : index
    %c0_23 = arith.constant 0 : index
    %43 = vector.load %arg8[%c0_22, %c0_23] : memref<128x128xf32, #tpu.memory_space<vmem>>, vector<128x128xf32>
    tpu.vector_store %arg8[%c0_22, %c0_23], %42 {strides = array<i32>} : memref<128x128xf32, #tpu.memory_space<vmem>>, vector<128x128xf32>,
    return
  }
  func.func @transform_0(%arg0: i32) -> (i32, i32) {
    %c0_i32 = arith.constant 0 : i32
    %c0_i32_0 = arith.constant 0 : i32
    return %arg0, %c0_i32 : i32, i32
  }
  func.func @transform_1(%arg0: i32) -> (i32, i32) {
    %c0_i32 = arith.constant 0 : i32
    %c0_i32_0 = arith.constant 0 : i32
    %c0_i32_1 = arith.constant 0 : i32
    return %c0_i32, %c0_i32_0 : i32, i32
  }
  func.func @transform_2(%arg0: i32) -> (i32, i32) {
    %c0_i32 = arith.constant 0 : i32
    %c0_i32_0 = arith.constant 0 : i32
    %c0_i32_1 = arith.constant 0 : i32
    return %c0_i32, %c0_i32_0 : i32, i32
  }
  func.func @transform_3(%arg0: i32) -> (i32, i32) {
    %c0_i32 = arith.constant 0 : i32
    %c0_i32_0 = arith.constant 0 : i32
    %c0_i32_1 = arith.constant 0 : i32
    return %c0_i32, %c0_i32_0 : i32, i32
  }
  func.func @transform_4(%arg0: i32) -> (i32, i32) {
    %c0_i32 = arith.constant 0 : i32
    %c0_i32_0 = arith.constant 0 : i32
    %c0_i32_1 = arith.constant 0 : i32
    return %c0_i32, %c0_i32_0 : i32, i32
  }
  func.func @transform_5(%arg0: i32) -> (i32, i32) {
    %c0_i32 = arith.constant 0 : i32
    %c0_i32_0 = arith.constant 0 : i32
    %c0_i32_1 = arith.constant 0 : i32
    return %c0_i32, %c0_i32_0 : i32, i32
  }
  func.func @transform_6(%arg0: i32) -> (i32, i32) {
    %c0_i32 = arith.constant 0 : i32
    %c0_i32_0 = arith.constant 0 : i32
    %c0_i32_1 = arith.constant 0 : i32
    return %c0_i32, %c0_i32_0 : i32, i32
  }
  func.func @transform_7(%arg0: i32) -> (i32, i32) {
    %c0_i32 = arith.constant 0 : i32
    %c0_i32_0 = arith.constant 0 : i32
    return %arg0, %c0_i32 : i32, i32
  }
}

</mosaic_0001>

<llo_original>
// kernel: tpu_custom_call.1
$region0: #{tpu_custom_call.1}
  #allocation0 [shape = 'u32[]', space=smem, size = 0x4, offset = 0x4, fixed_abs, tag = 'smem constant byte address 0x4 - core index']
  #allocation1 [shape = 'u32[144,128]{1,0:T(1,128)}', space=vmem, size = 0x12000, scoped, tag = 'internal scratch']
  %s0 = inlined_call_operand.hbm [shape: f32[256,128], index: 0, kind: input, shape index: {}]
  %s1 = inlined_call_operand.hbm [shape: f32[128,128], index: 1, kind: input, shape index: {}]
  %s2 = inlined_call_operand.vmem [shape: f32[1,128], index: 2, kind: input, shape index: {}]
  %s3 = inlined_call_operand.vmem [shape: f32[1,128], index: 3, kind: input, shape index: {}]
  %s4 = inlined_call_operand.vmem [shape: f32[1,128], index: 4, kind: input, shape index: {}]
  %s5 = inlined_call_operand.hbm [shape: f32[128,128], index: 5, kind: input, shape index: {}]
  %s6 = inlined_call_operand.vmem [shape: f32[1,128], index: 6, kind: input, shape index: {}]
  %s7 = inlined_call_operand.hbm [shape: f32[256,128], index: 7, kind: output, shape index: {}]
  %s8 = sld [smem:[#allocation0]]
  $region73: #{tpu_custom_call.1} parent=0
    _
  %s10 = ssub.s32 1, %s8
  %s11 = scalar_select 0, %s10, %s8
  $region1: #{tpu_custom_call.1} parent=0
    #allocation2 [shape = 'u8[131072]{0}', space=vmem, size = 0x20000, scoped, tag = 'input window, operand 0']
    #allocation3 [shape = 's32[2]{0}', space=sflag, size = 0x8, scoped, tag = 'scoped memory for tpu_custom_call.1']
    #allocation4 [shape = 's32[2]{0}', space=sflag, size = 0x8, scoped, tag = 'scoped memory for tpu_custom_call.1']
    #allocation5 [shape = 'u8[65536]{0}', space=vmem, size = 0x10000, scoped, tag = 'input window, operand 1, single buffered']
    #allocation6 [shape = 's32[1]{0}', space=sflag, size = 0x4, scoped, tag = 'scoped memory for tpu_custom_call.1']
    #allocation7 [shape = 'u8[65536]{0}', space=vmem, size = 0x10000, scoped, tag = 'input window, operand 5, single buffered']
    #allocation8 [shape = 'u8[131072]{0}', space=vmem, size = 0x20000, scoped, tag = 'output window, operand 0']
    %12 = vsyncpa [#allocation3], 0
    %s13 = scalar_lea.sflag [#allocation3], 1
    %14 = vsyncpa %s13, 0
    %15 = vsyncpa [#allocation6], 0
    %16 = vsyncpa [#allocation4], 0
    %s17 = scalar_lea.sflag [#allocation4], 1
    %18 = vsyncpa %s17, 0
    loop: start=0, step=1, limit=4
    $region2: #{tpu_custom_call.1} parent=1 // loop_pre_header
      _
    $region3: #{tpu_custom_call.1} parent=1 // loop_header
      %s20 = sphi 0, %s24
      %p21 = scmp.ge.s32.totalorder %s20, 4
      %s30 = sphi 0, %s32
      %s33 = sphi 0, %s30
      %s34 = sphi 0, %s33
      %s50 = sphi 0, %s34
      %s54 = sphi 0, %s54
      %s56 = sphi 0, %s54
      %s57 = sphi 0, %s56
      %s71 = sphi 0, %s57
      %s75 = sphi 0, %s75
      %s77 = sphi 0, %s75
      %s78 = sphi 0, %s77
      %s92 = sphi 0, %s78
      %s96 = sphi 0, %s96
      %s98 = sphi 0, %s96
      %s99 = sphi 0, %s98
      %s113 = sphi 0, %s99
      %s117 = sphi 0, %s117
      %s119 = sphi 0, %s117
      %s120 = sphi 0, %s119
      %s134 = sphi 0, %s120
      %s138 = sphi 0, %s138
      %s140 = sphi 0, %s138
      %s141 = sphi 0, %s140
      %s155 = sphi 0, %s141
      %s159 = sphi 0, %s159
      %s161 = sphi 0, %s159
      %s162 = sphi 0, %s161
      %s176 = sphi 0, %s162
      %s182 = sphi 0, %s184
      %s185 = sphi 0, %s182
      %s186 = sphi 0, %s185
      %s202 = sphi 0, %s186
    $region4: #{tpu_custom_call.1} parent=1 // loop_header_branch
      %23 = sbr.rel (%p21) target = $region8
    $region5: #{tpu_custom_call.1} parent=1 // loop_body
      %s25 = ssub.s32 %s20, 1
      %s26 = ssub.s32 %s20, 2
      %s27 = sadd.s32 %s20, 1
      %s28 = ssub.s32 %s20, %s27
      %p29 = scmp.eq.s32.totalorder %s28, 0
      %s31 = sadd.s32 %s30, 1
      %s32 = scalar_select %p29, %s30, %s31
      %p35 = pneg %p29
      %p36 = scmp.eq.s32.totalorder %s20, 1
      %p37 = por %p35, %p36
      %p38 = scmp.ne.s32.totalorder %s30, %s33
      %p39 = scmp.eq.s32.totalorder %s20, 0
      %p40 = por %p38, %p39
      %p41 = scmp.ne.s32.totalorder %s30, %s33
      %p42 = scmp.eq.s32.totalorder %s25, 1
      %p43 = por %p41, %p42
      %p44 = scmp.ne.s32.totalorder %s33, %s34
      %p45 = scmp.eq.s32.totalorder %s25, 0
      %p46 = por %p44, %p45
      %p47 = scmp.ne.s32.totalorder %s33, %s34
      %p48 = scmp.eq.s32.totalorder %s26, 1
      %p49 = por %p47, %p48
      %p51 = scmp.ne.s32.totalorder %s34, %s50
      %p52 = scmp.eq.s32.totalorder %s26, 0
      %p53 = por %p51, %p52
      %s55 = sadd.s32 %s54, 1
      %p58 = scmp.eq.s32.totalorder %s20, 1
      %p59 = scmp.ne.s32.totalorder %s54, %s56
      %p60 = scmp.eq.s32.totalorder %s20, 0
      %p61 = por %p59, %p60
      %p62 = scmp.ne.s32.totalorder %s54, %s56
      %p63 = scmp.eq.s32.totalorder %s25, 1
      %p64 = por %p62, %p63
      %p65 = scmp.ne.s32.totalorder %s56, %s57
      %p66 = scmp.eq.s32.totalorder %s25, 0
      %p67 = por %p65, %p66
      %p68 = scmp.ne.s32.totalorder %s56, %s57
      %p69 = scmp.eq.s32.totalorder %s26, 1
      %p70 = por %p68, %p69
      %p72 = scmp.ne.s32.totalorder %s57, %s71
      %p73 = scmp.eq.s32.totalorder %s26, 0
      %p74 = por %p72, %p73
      %s76 = sadd.s32 %s75, 1
      %p79 = scmp.eq.s32.totalorder %s20, 1
      %p80 = scmp.ne.s32.totalorder %s75, %s77
      %p81 = scmp.eq.s32.totalorder %s20, 0
      %p82 = por %p80, %p81
      %p83 = scmp.ne.s32.totalorder %s75, %s77
      %p84 = scmp.eq.s32.totalorder %s25, 1
      %p85 = por %p83, %p84
      %p86 = scmp.ne.s32.totalorder %s77, %s78
      %p87 = scmp.eq.s32.totalorder %s25, 0
      %p88 = por %p86, %p87
      %p89 = scmp.ne.s32.totalorder %s77, %s78
      %p90 = scmp.eq.s32.totalorder %s26, 1
      %p91 = por %p89, %p90
      %p93 = scmp.ne.s32.totalorder %s78, %s92
      %p94 = scmp.eq.s32.totalorder %s26, 0
      %p95 = por %p93, %p94
      %s97 = sadd.s32 %s96, 1
      %p100 = scmp.eq.s32.totalorder %s20, 1
      %p101 = scmp.ne.s32.totalorder %s96, %s98
      %p102 = scmp.eq.s32.totalorder %s20, 0
      %p103 = por %p101, %p102
      %p104 = scmp.ne.s32.totalorder %s96, %s98
      %p105 = scmp.eq.s32.totalorder %s25, 1
      %p106 = por %p104, %p105
      %p107 = scmp.ne.s32.totalorder %s98, %s99
      %p108 = scmp.eq.s32.totalorder %s25, 0
      %p109 = por %p107, %p108
      %p110 = scmp.ne.s32.totalorder %s98, %s99
      %p111 = scmp.eq.s32.totalorder %s26, 1
      %p112 = por %p110, %p111
      %p114 = scmp.ne.s32.totalorder %s99, %s113
      %p115 = scmp.eq.s32.totalorder %s26, 0
      %p116 = por %p114, %p115
      %s118 = sadd.s32 %s117, 1
      %p121 = scmp.eq.s32.totalorder %s20, 1
      %p122 = scmp.ne.s32.totalorder %s117, %s119
      %p123 = scmp.eq.s32.totalorder %s20, 0
      %p124 = por %p122, %p123
      %p125 = scmp.ne.s32.totalorder %s117, %s119
      %p126 = scmp.eq.s32.totalorder %s25, 1
      %p127 = por %p125, %p126
      %p128 = scmp.ne.s32.totalorder %s119, %s120
      %p129 = scmp.eq.s32.totalorder %s25, 0
      %p130 = por %p128, %p129
      %p131 = scmp.ne.s32.totalorder %s119, %s120
      %p132 = scmp.eq.s32.totalorder %s26, 1
      %p133 = por %p131, %p132
      %p135 = scmp.ne.s32.totalorder %s120, %s134
      %p136 = scmp.eq.s32.totalorder %s26, 0
      %p137 = por %p135, %p136
      %s139 = sadd.s32 %s138, 1
      %p142 = scmp.eq.s32.totalorder %s20, 1
      %p143 = scmp.ne.s32.totalorder %s138, %s140
      %p144 = scmp.eq.s32.totalorder %s20, 0
      %p145 = por %p143, %p144
      %p146 = scmp.ne.s32.totalorder %s138, %s140
      %p147 = scmp.eq.s32.totalorder %s25, 1
      %p148 = por %p146, %p147
      %p149 = scmp.ne.s32.totalorder %s140, %s141
      %p150 = scmp.eq.s32.totalorder %s25, 0
      %p151 = por %p149, %p150
      %p152 = scmp.ne.s32.totalorder %s140, %s141
      %p153 = scmp.eq.s32.totalorder %s26, 1
      %p154 = por %p152, %p153
      %p156 = scmp.ne.s32.totalorder %s141, %s155
      %p157 = scmp.eq.s32.totalorder %s26, 0
      %p158 = por %p156, %p157
      %s160 = sadd.s32 %s159, 1
      %p163 = scmp.eq.s32.totalorder %s20, 1
      %p164 = scmp.ne.s32.totalorder %s159, %s161
      %p165 = scmp.eq.s32.totalorder %s20, 0
      %p166 = por %p164, %p165
      %p167 = scmp.ne.s32.totalorder %s159, %s161
      %p168 = scmp.eq.s32.totalorder %s25, 1
      %p169 = por %p167, %p168
      %p170 = scmp.ne.s32.totalorder %s161, %s162
      %p171 = scmp.eq.s32.totalorder %s25, 0
      %p172 = por %p170, %p171
      %p173 = scmp.ne.s32.totalorder %s161, %s162
      %p174 = scmp.eq.s32.totalorder %s26, 1
      %p175 = por %p173, %p174
      %p177 = scmp.ne.s32.totalorder %s162, %s176
      %p178 = scmp.eq.s32.totalorder %s26, 0
      %p179 = por %p177, %p178
      %s180 = ssub.s32 %s20, %s27
      %p181 = scmp.eq.s32.totalorder %s180, 0
      %s183 = sadd.s32 %s182, 1
      %s184 = scalar_select %p181, %s182, %s183
      %p187 = pneg %p181
      %p188 = scmp.eq.s32.totalorder %s20, 1
      %p189 = por %p187, %p188
      %p190 = scmp.ne.s32.totalorder %s182, %s185
      %p191 = scmp.eq.s32.totalorder %s20, 0
      %p192 = por %p190, %p191
      %p193 = scmp.ne.s32.totalorder %s182, %s185
      %p194 = scmp.eq.s32.totalorder %s25, 1
      %p195 = por %p193, %p194
      %p196 = scmp.ne.s32.totalorder %s185, %s186
      %p197 = scmp.eq.s32.totalorder %s25, 0
      %p198 = por %p196, %p197
      %p199 = scmp.ne.s32.totalorder %s185, %s186
      %p200 = scmp.eq.s32.totalorder %s26, 1
      %p201 = por %p199, %p200
      %p203 = scmp.ne.s32.totalorder %s186, %s202
      %p204 = scmp.eq.s32.totalorder %s26, 0
      %p205 = por %p203, %p204
      %p206 = scmp.le.s32.totalorder 1, %s20
      %p207 = scmp.lt.s32.totalorder %s20, 3
      %p208 = pnand %p206, %p207
      %p209 = pneg %p208
      // Predicated region
      $region9: #{tpu_custom_call.1} parent=5 // pred_check
        _
      $region10: #{tpu_custom_call.1} parent=5 // pred_check_branch
        %211 = sbr.rel (%p208) target = $region12
      $region11: #{tpu_custom_call.1} parent=5 // pred_region
        %s212 = ssub.s32 %s20, 1
        // Predicated region
        $region13: #{tpu_custom_call.1} parent=11 // pred_check
          %p213 = pneg %p67
        $region14: #{tpu_custom_call.1} parent=11 // pred_check_branch
          %215 = sbr.rel (%p213) target = $region16
        $region15: #{tpu_custom_call.1} parent=11 // pred_region
          %s217 = ssub.s32 2048, 2048
          %218 = vsyncadd [#allocation6], %s217
          %s219 = sshll.u32 [#allocation5], 4
          %s220 = int_to_ptr.vmem [resolvable:$true] %s219
          %225 = dma.hbm_to_vmem [thread:$0]  %s1, 2048, %s220, [#allocation6], 128, 128, 8
        $region16: #{tpu_custom_call.1} parent=11 // pred_fallthru
          _
        // Predicated region
        $region17: #{tpu_custom_call.1} parent=11 // pred_check
          %p226 = pneg %p88
        $region18: #{tpu_custom_call.1} parent=11 // pred_check_branch
          %228 = sbr.rel (%p226) target = $region20
        $region19: #{tpu_custom_call.1} parent=11 // pred_region
          _
        $region20: #{tpu_custom_call.1} parent=11 // pred_fallthru
          _
        // Predicated region
        $region21: #{tpu_custom_call.1} parent=11 // pred_check
          %p229 = pneg %p109
        $region22: #{tpu_custom_call.1} parent=11 // pred_check_branch
          %231 = sbr.rel (%p229) target = $region24
        $region23: #{tpu_custom_call.1} parent=11 // pred_region
          _
        $region24: #{tpu_custom_call.1} parent=11 // pred_fallthru
          _
        // Predicated region
        $region25: #{tpu_custom_call.1} parent=11 // pred_check
          %p232 = pneg %p130
        $region26: #{tpu_custom_call.1} parent=11 // pred_check_branch
          %234 = sbr.rel (%p232) target = $region28
        $region27: #{tpu_custom_call.1} parent=11 // pred_region
          _
        $region28: #{tpu_custom_call.1} parent=11 // pred_fallthru
          _
        // Predicated region
        $region29: #{tpu_custom_call.1} parent=11 // pred_check
          %p235 = pneg %p151
        $region30: #{tpu_custom_call.1} parent=11 // pred_check_branch
          %237 = sbr.rel (%p235) target = $region32
        $region31: #{tpu_custom_call.1} parent=11 // pred_region
          %s239 = ssub.s32 2048, 2048
          %240 = vsyncadd [#allocation6], %s239
          %s241 = sshll.u32 [#allocation7], 4
          %s242 = int_to_ptr.vmem [resolvable:$true] %s241
          %247 = dma.hbm_to_vmem [thread:$0]  %s5, 2048, %s242, [#allocation6], 128, 128, 8
        $region32: #{tpu_custom_call.1} parent=11 // pred_fallthru
          _
        // Predicated region
        $region33: #{tpu_custom_call.1} parent=11 // pred_check
          %p248 = pneg %p172
        $region34: #{tpu_custom_call.1} parent=11 // pred_check_branch
          %250 = sbr.rel (%p248) target = $region36
        $region35: #{tpu_custom_call.1} parent=11 // pred_region
          _
        $region36: #{tpu_custom_call.1} parent=11 // pred_fallthru
          _
      $region12: #{tpu_custom_call.1} parent=5 // pred_fallthru
        _
      %p251 = scmp.lt.s32.totalorder %s20, 2
      // Predicated region
      $region37: #{tpu_custom_call.1} parent=5 // pred_check
        %p252 = pneg %p251
      $region38: #{tpu_custom_call.1} parent=5 // pred_check_branch
        %254 = sbr.rel (%p252) target = $region40
      $region39: #{tpu_custom_call.1} parent=5 // pred_region
        // Predicated region
        $region41: #{tpu_custom_call.1} parent=39 // pred_check
          %p255 = pneg %p40
        $region42: #{tpu_custom_call.1} parent=39 // pred_check_branch
          %257 = sbr.rel (%p255) target = $region44
        $region43: #{tpu_custom_call.1} parent=39 // pred_region
          %s258 = sand.u32 %s30, 1
          %s259 = scalar_lea.sflag [#allocation3], %s258
          %s260 = sand.u32 %s30, 1
          %s261 = smul.addr %s260, 128
          %s262 = scalar_lea.vmem [#allocation2], %s261
          %s263 = smul.u32 16, %s20
          %s265 = ssub.s32 2048, 2048
          %266 = vsyncadd %s259, %s265
          %s267 = smul.addr %s263, 128
          %s268 = scalar_lea.hbm %s0, %s267
          %s269 = sshll.u32 %s262, 4
          %s270 = int_to_ptr.vmem [resolvable:$true] %s269
          %275 = dma.hbm_to_vmem [thread:$0]  %s268, 2048, %s270, %s259, 128, 128, 8
        $region44: #{tpu_custom_call.1} parent=39 // pred_fallthru
          _
      $region40: #{tpu_custom_call.1} parent=5 // pred_fallthru
        _
      %p276 = scmp.le.s32.totalorder 1, %s20
      %p277 = scmp.lt.s32.totalorder %s20, 3
      %p278 = pnand %p276, %p277
      %p279 = pneg %p278
      // Predicated region
      $region45: #{tpu_custom_call.1} parent=5 // pred_check
        _
      $region46: #{tpu_custom_call.1} parent=5 // pred_check_branch
        %281 = sbr.rel (%p278) target = $region48
      $region47: #{tpu_custom_call.1} parent=5 // pred_region
        %s282 = ssub.s32 %s20, 1
        %s283 = sand.u32 %s33, 1
        %s284 = scalar_lea.sflag [#allocation3], %s283
        %s285 = sand.u32 %s33, 1
        %s286 = smul.addr %s285, 128
        %s287 = scalar_lea.vmem [#allocation2], %s286
        // Predicated region
        $region49: #{tpu_custom_call.1} parent=47 // pred_check
          %p288 = pneg %p46
        $region50: #{tpu_custom_call.1} parent=47 // pred_check_branch
          %290 = sbr.rel (%p288) target = $region52
        $region51: #{tpu_custom_call.1} parent=47 // pred_region
          %291 = dma.done %s284, 2048
        $region52: #{tpu_custom_call.1} parent=47 // pred_fallthru
          _
        // Predicated region
        $region53: #{tpu_custom_call.1} parent=47 // pred_check
          %p292 = pneg %p67
        $region54: #{tpu_custom_call.1} parent=47 // pred_check_branch
          %294 = sbr.rel (%p292) target = $region56
        $region55: #{tpu_custom_call.1} parent=47 // pred_region
          %295 = dma.done [#allocation6], 2048
        $region56: #{tpu_custom_call.1} parent=47 // pred_fallthru
          _
        // Predicated region
        $region57: #{tpu_custom_call.1} parent=47 // pred_check
          %p296 = pneg %p151
        $region58: #{tpu_custom_call.1} parent=47 // pred_check_branch
          %298 = sbr.rel (%p296) target = $region60
        $region59: #{tpu_custom_call.1} parent=47 // pred_region
          %299 = dma.done [#allocation6], 2048
        $region60: #{tpu_custom_call.1} parent=47 // pred_fallthru
          _
        %s300 = sand.u32 %s33, 1
        %s301 = scalar_lea.sflag [#allocation3], %s300
        %s302 = sand.u32 %s33, 1
        %s303 = smul.addr %s302, 128
        %s304 = scalar_lea.vmem [#allocation2], %s303
        %p305 = pneg %p46
        %p306 = pneg %p43
        %p307 = pneg %p67
        %p308 = pneg %p64
        %p309 = pneg %p88
        %p310 = pneg %p85
        %p311 = pneg %p109
        %p312 = pneg %p106
        %p313 = pneg %p130
        %p314 = pneg %p127
        %p315 = pneg %p151
        %p316 = pneg %p148
        %p317 = pneg %p172
        %p318 = pneg %p169
        %p319 = pneg %p198
        %p320 = pneg %p195
        %s321 = sand.u32 %s185, 1
        %s322 = scalar_lea.sflag [#allocation4], %s321
        %s323 = sand.u32 %s185, 1
        %s324 = smul.addr %s323, 128
        %s325 = scalar_lea.vmem [#allocation8], %s324
        %s326 = smul.u32 16, %s25
        %s327 = smul.u32 16, %s25
        %v328 = vld [vmem:[%s287] sm:$0xff]
        %v329 = vld [vmem:[%s287 + $0x8] sm:$0xff]
        %v330 = vld [vmem:[%s287 + $0x10] sm:$0xff]
        %v331 = vld [vmem:[%s287 + $0x18] sm:$0xff]
        %v332 = vld [vmem:[%s287 + $0x20] sm:$0xff]
        %v333 = vld [vmem:[%s287 + $0x28] sm:$0xff]
        %v334 = vld [vmem:[%s287 + $0x30] sm:$0xff]
        %v335 = vld [vmem:[%s287 + $0x38] sm:$0xff]
        %v336 = vld [vmem:[%s287 + $0x40] sm:$0xff]
        %v337 = vld [vmem:[%s287 + $0x48] sm:$0xff]
        %v338 = vld [vmem:[%s287 + $0x50] sm:$0xff]
        %v339 = vld [vmem:[%s287 + $0x58] sm:$0xff]
        %v340 = vld [vmem:[%s287 + $0x60] sm:$0xff]
        %v341 = vld [vmem:[%s287 + $0x68] sm:$0xff]
        %v342 = vld [vmem:[%s287 + $0x70] sm:$0xff]
        %v343 = vld [vmem:[%s287 + $0x78] sm:$0xff]
        %v344 = vld [vmem:[#allocation5] sm:$0xff]
        %v345 = vld [vmem:[#allocation5 + $0x8] sm:$0xff]
        %v346 = vld [vmem:[#allocation5 + $0x10] sm:$0xff]
        %v347 = vld [vmem:[#allocation5 + $0x18] sm:$0xff]
        %v348 = vld [vmem:[#allocation5 + $0x20] sm:$0xff]
        %v349 = vld [vmem:[#allocation5 + $0x28] sm:$0xff]
        %v350 = vld [vmem:[#allocation5 + $0x30] sm:$0xff]
        %v351 = vld [vmem:[#allocation5 + $0x38] sm:$0xff]
        %v352 = vld [vmem:[#allocation5 + $0x40] sm:$0xff]
        %v353 = vld [vmem:[#allocation5 + $0x48] sm:$0xff]
        %v354 = vld [vmem:[#allocation5 + $0x50] sm:$0xff]
        %v355 = vld [vmem:[#allocation5 + $0x58] sm:$0xff]
        %v356 = vld [vmem:[#allocation5 + $0x60] sm:$0xff]
        %v357 = vld [vmem:[#allocation5 + $0x68] sm:$0xff]
        %v358 = vld [vmem:[#allocation5 + $0x70] sm:$0xff]
        %v359 = vld [vmem:[#allocation5 + $0x78] sm:$0xff]
        %v360 = vld [vmem:[%s2] sm:$0x1]
        %v362 = vlaneseq
        %v363 = vshrl.u32 %v362, 7
        %v364 = vsub.s32 0, %v363
        %v365 = vrot.slane %v360, %v364
        %367 = vmatprep.subr.mxu0 0.0
        %368 = vmatpush1.msra.mxu0 %v344
        %369 = vmatprep.subr.mxu0 0.0
        %370 = vmatpush1.msra.mxu0 %v345
        %371 = vmatprep.subr.mxu0 0.0
        %372 = vmatpush1.msra.mxu0 %v346
        %373 = vmatprep.subr.mxu0 0.0
        %374 = vmatpush1.msra.mxu0 %v347
        %375 = vmatprep.subr.mxu0 0.0
        %376 = vmatpush1.msra.mxu0 %v348
        %377 = vmatprep.subr.mxu0 0.0
        %378 = vmatpush1.msra.mxu0 %v349
        %379 = vmatprep.subr.mxu0 0.0
        %380 = vmatpush1.msra.mxu0 %v350
        %381 = vmatprep.subr.mxu0 0.0
        %382 = vmatpush1.msra.mxu0 %v351
        %383 = vmatprep.subr.mxu0 0.0
        %384 = vmatpush1.msra.mxu0 %v352
        %385 = vmatprep.subr.mxu0 0.0
        %386 = vmatpush1.msra.mxu0 %v353
        %387 = vmatprep.subr.mxu0 0.0
        %388 = vmatpush1.msra.mxu0 %v354
        %389 = vmatprep.subr.mxu0 0.0
        %390 = vmatpush1.msra.mxu0 %v355
        %391 = vmatprep.subr.mxu0 0.0
        %392 = vmatpush1.msra.mxu0 %v356
        %393 = vmatprep.subr.mxu0 0.0
        %394 = vmatpush1.msra.mxu0 %v357
        %395 = vmatprep.subr.mxu0 0.0
        %396 = vmatpush1.msra.mxu0 %v358
        %397 = vmatprep.subr.mxu0 0.0
        %398 = vmatpush1.msra.mxu0 %v359
        %399 = vmatprep.subr.mxu0 0.0
        %400 = vmatpush1.msra.mxu0 0.0
        %401 = vmatprep.subr.mxu0 0.0
        %402 = vmatpush1.msra.mxu0 0.0
        %403 = vmatprep.subr.mxu0 0.0
        %404 = vmatpush1.msra.mxu0 0.0
        %405 = vmatprep.subr.mxu0 0.0
        %406 = vmatpush1.msra.mxu0 0.0
        %407 = vmatprep.subr.mxu0 0.0
        %408 = vmatpush1.msra.mxu0 0.0
        %409 = vmatprep.subr.mxu0 0.0
        %410 = vmatpush1.msra.mxu0 0.0
        %411 = vmatprep.subr.mxu0 0.0
        %412 = vmatpush1.msra.mxu0 0.0
        %413 = vmatprep.subr.mxu0 0.0
        %414 = vmatpush1.msra.mxu0 0.0
        %415 = vmatprep.subr.mxu0 0.0
        %416 = vmatpush1.msra.mxu0 0.0
        %417 = vmatprep.subr.mxu0 0.0
        %418 = vmatpush1.msra.mxu0 0.0
        %419 = vmatprep.subr.mxu0 0.0
        %420 = vmatpush1.msra.mxu0 0.0
        %421 = vmatprep.subr.mxu0 0.0
        %422 = vmatpush1.msra.mxu0 0.0
        %423 = vmatprep.subr.mxu0 0.0
        %424 = vmatpush1.msra.mxu0 0.0
        %425 = vmatprep.subr.mxu0 0.0
        %426 = vmatpush1.msra.mxu0 0.0
        %427 = vmatprep.subr.mxu0 0.0
        %428 = vmatpush1.msra.mxu0 0.0
        %429 = vmatprep.subr.mxu0 0.0
        %430 = vmatpush1.msra.mxu0 0.0
        %431 = vmatprep.mubr.f32.mxu0 0.0
        %432 = vmatmul.mubr.f32.gmra.mrb[0].mxu0 %v328
        %v433 = vpop.f32.mrb[0].mxu0
        %v434 = vadd.f32 %v365, %v433
        %v435 = vpop.f32.mrb[0].mxu0
        %436 = vmatprep.mubr.f32.mxu0 0.0
        %437 = vmatmul.mubr.f32.gmra.mrb[0].mxu0 %v329
        %v438 = vpop.f32.mrb[0].mxu0
        %v439 = vadd.f32 %v365, %v438
        %v440 = vpop.f32.mrb[0].mxu0
        %441 = vmatprep.mubr.f32.mxu0 0.0
        %442 = vmatmul.mubr.f32.gmra.mrb[0].mxu0 %v330
        %v443 = vpop.f32.mrb[0].mxu0
        %v444 = vadd.f32 %v365, %v443
        %v445 = vpop.f32.mrb[0].mxu0
        %446 = vmatprep.mubr.f32.mxu0 0.0
        %447 = vmatmul.mubr.f32.gmra.mrb[0].mxu0 %v331
        %v448 = vpop.f32.mrb[0].mxu0
        %v449 = vadd.f32 %v365, %v448
        %v450 = vpop.f32.mrb[0].mxu0
        %451 = vmatprep.mubr.f32.mxu0 0.0
        %452 = vmatmul.mubr.f32.gmra.mrb[0].mxu0 %v332
        %v453 = vpop.f32.mrb[0].mxu0
        %v454 = vadd.f32 %v365, %v453
        %v455 = vpop.f32.mrb[0].mxu0
        %456 = vmatprep.mubr.f32.mxu0 0.0
        %457 = vmatmul.mubr.f32.gmra.mrb[0].mxu0 %v333
        %v458 = vpop.f32.mrb[0].mxu0
        %v459 = vadd.f32 %v365, %v458
        %v460 = vpop.f32.mrb[0].mxu0
        %461 = vmatprep.mubr.f32.mxu0 0.0
        %462 = vmatmul.mubr.f32.gmra.mrb[0].mxu0 %v334
        %v463 = vpop.f32.mrb[0].mxu0
        %v464 = vadd.f32 %v365, %v463
        %v465 = vpop.f32.mrb[0].mxu0
        %466 = vmatprep.mubr.f32.mxu0 0.0
        %467 = vmatmul.mubr.f32.gmra.mrb[0].mxu0 %v335
        %v468 = vpop.f32.mrb[0].mxu0
        %v469 = vadd.f32 %v365, %v468
        %v470 = vpop.f32.mrb[0].mxu0
        %471 = vmatprep.mubr.f32.mxu0 0.0
        %472 = vmatmul.mubr.f32.gmra.mrb[0].mxu0 %v336
        %v473 = vpop.f32.mrb[0].mxu0
        %v474 = vadd.f32 %v365, %v473
        %v475 = vpop.f32.mrb[0].mxu0
        %476 = vmatprep.mubr.f32.mxu0 0.0
        %477 = vmatmul.mubr.f32.gmra.mrb[0].mxu0 %v337
        %v478 = vpop.f32.mrb[0].mxu0
        %v479 = vadd.f32 %v365, %v478
        %v480 = vpop.f32.mrb[0].mxu0
        %481 = vmatprep.mubr.f32.mxu0 0.0
        %482 = vmatmul.mubr.f32.gmra.mrb[0].mxu0 %v338
        %v483 = vpop.f32.mrb[0].mxu0
        %v484 = vadd.f32 %v365, %v483
        %v485 = vpop.f32.mrb[0].mxu0
        %486 = vmatprep.mubr.f32.mxu0 0.0
        %487 = vmatmul.mubr.f32.gmra.mrb[0].mxu0 %v339
        %v488 = vpop.f32.mrb[0].mxu0
        %v489 = vadd.f32 %v365, %v488
        %v490 = vpop.f32.mrb[0].mxu0
        %491 = vmatprep.mubr.f32.mxu0 0.0
        %492 = vmatmul.mubr.f32.gmra.mrb[0].mxu0 %v340
        %v493 = vpop.f32.mrb[0].mxu0
        %v494 = vadd.f32 %v365, %v493
        %v495 = vpop.f32.mrb[0].mxu0
        %496 = vmatprep.mubr.f32.mxu0 0.0
        %497 = vmatmul.mubr.f32.gmra.mrb[0].mxu0 %v341
        %v498 = vpop.f32.mrb[0].mxu0
        %v499 = vadd.f32 %v365, %v498
        %v500 = vpop.f32.mrb[0].mxu0
        %501 = vmatprep.mubr.f32.mxu0 0.0
        %502 = vmatmul.mubr.f32.gmra.mrb[0].mxu0 %v342
        %v503 = vpop.f32.mrb[0].mxu0
        %v504 = vadd.f32 %v365, %v503
        %v505 = vpop.f32.mrb[0].mxu0
        %506 = vmatprep.mubr.f32.mxu0 0.0
        %507 = vmatmul.mubr.f32.gmra.mrb[0].mxu0 %v343
        %v508 = vpop.f32.mrb[0].mxu0
        %v509 = vadd.f32 %v365, %v508
        %v510 = vpop.f32.mrb[0].mxu0
        %511 = vdwg.mxu0
        %512 = vadd.xlane.f32.xlu0 %v434
        %v513 = vpop.xlane.xlu0 %512
        %514 = vadd.xlane.f32.xlu0 %v439
        %v515 = vpop.xlane.xlu0 %514
        %516 = vadd.xlane.f32.xlu0 %v444
        %v517 = vpop.xlane.xlu0 %516
        %518 = vadd.xlane.f32.xlu0 %v449
        %v519 = vpop.xlane.xlu0 %518
        %520 = vadd.xlane.f32.xlu0 %v454
        %v521 = vpop.xlane.xlu0 %520
        %522 = vadd.xlane.f32.xlu0 %v459
        %v523 = vpop.xlane.xlu0 %522
        %524 = vadd.xlane.f32.xlu0 %v464
        %v525 = vpop.xlane.xlu0 %524
        %526 = vadd.xlane.f32.xlu0 %v469
        %v527 = vpop.xlane.xlu0 %526
        %528 = vadd.xlane.f32.xlu0 %v474
        %v529 = vpop.xlane.xlu0 %528
        %530 = vadd.xlane.f32.xlu0 %v479
        %v531 = vpop.xlane.xlu0 %530
        %532 = vadd.xlane.f32.xlu0 %v484
        %v533 = vpop.xlane.xlu0 %532
        %534 = vadd.xlane.f32.xlu0 %v489
        %v535 = vpop.xlane.xlu0 %534
        %536 = vadd.xlane.f32.xlu0 %v494
        %v537 = vpop.xlane.xlu0 %536
        %538 = vadd.xlane.f32.xlu0 %v499
        %v539 = vpop.xlane.xlu0 %538
        %540 = vadd.xlane.f32.xlu0 %v504
        %v541 = vpop.xlane.xlu0 %540
        %542 = vadd.xlane.f32.xlu0 %v509
        %v543 = vpop.xlane.xlu0 %542
        %v544 = vrcp.pop 128.0
        %v545 = vmul.f32 %v513, %v544
        %v546 = vmul.f32 %v515, %v544
        %v547 = vmul.f32 %v517, %v544
        %v548 = vmul.f32 %v519, %v544
        %v549 = vmul.f32 %v521, %v544
        %v550 = vmul.f32 %v523, %v544
        %v551 = vmul.f32 %v525, %v544
        %v552 = vmul.f32 %v527, %v544
        %v553 = vmul.f32 %v529, %v544
        %v554 = vmul.f32 %v531, %v544
        %v555 = vmul.f32 %v533, %v544
        %v556 = vmul.f32 %v535, %v544
        %v557 = vmul.f32 %v537, %v544
        %v558 = vmul.f32 %v539, %v544
        %v559 = vmul.f32 %v541, %v544
        %v560 = vmul.f32 %v543, %v544
        %v561 = vsub.f32 %v434, %v545
        %v562 = vsub.f32 %v439, %v546
        %v563 = vsub.f32 %v444, %v547
        %v564 = vsub.f32 %v449, %v548
        %v565 = vsub.f32 %v454, %v549
        %v566 = vsub.f32 %v459, %v550
        %v567 = vsub.f32 %v464, %v551
        %v568 = vsub.f32 %v469, %v552
        %v569 = vsub.f32 %v474, %v553
        %v570 = vsub.f32 %v479, %v554
        %v571 = vsub.f32 %v484, %v555
        %v572 = vsub.f32 %v489, %v556
        %v573 = vsub.f32 %v494, %v557
        %v574 = vsub.f32 %v499, %v558
        %v575 = vsub.f32 %v504, %v559
        %v576 = vsub.f32 %v509, %v560
        %v577 = vmul.f32 %v561, %v561
        %v578 = vmul.f32 %v562, %v562
        %v579 = vmul.f32 %v563, %v563
        %v580 = vmul.f32 %v564, %v564
        %v581 = vmul.f32 %v565, %v565
        %v582 = vmul.f32 %v566, %v566
        %v583 = vmul.f32 %v567, %v567
        %v584 = vmul.f32 %v568, %v568
        %v585 = vmul.f32 %v569, %v569
        %v586 = vmul.f32 %v570, %v570
        %v587 = vmul.f32 %v571, %v571
        %v588 = vmul.f32 %v572, %v572
        %v589 = vmul.f32 %v573, %v573
        %v590 = vmul.f32 %v574, %v574
        %v591 = vmul.f32 %v575, %v575
        %v592 = vmul.f32 %v576, %v576
        %593 = vadd.xlane.f32.xlu0 %v577
        %v594 = vpop.xlane.xlu0 %593
        %595 = vadd.xlane.f32.xlu0 %v578
        %v596 = vpop.xlane.xlu0 %595
        %597 = vadd.xlane.f32.xlu0 %v579
        %v598 = vpop.xlane.xlu0 %597
        %599 = vadd.xlane.f32.xlu0 %v580
        %v600 = vpop.xlane.xlu0 %599
        %601 = vadd.xlane.f32.xlu0 %v581
        %v602 = vpop.xlane.xlu0 %601
        %603 = vadd.xlane.f32.xlu0 %v582
        %v604 = vpop.xlane.xlu0 %603
        %605 = vadd.xlane.f32.xlu0 %v583
        %v606 = vpop.xlane.xlu0 %605
        %607 = vadd.xlane.f32.xlu0 %v584
        %v608 = vpop.xlane.xlu0 %607
        %609 = vadd.xlane.f32.xlu0 %v585
        %v610 = vpop.xlane.xlu0 %609
        %611 = vadd.xlane.f32.xlu0 %v586
        %v612 = vpop.xlane.xlu0 %611
        %613 = vadd.xlane.f32.xlu0 %v587
        %v614 = vpop.xlane.xlu0 %613
        %615 = vadd.xlane.f32.xlu0 %v588
        %v616 = vpop.xlane.xlu0 %615
        %617 = vadd.xlane.f32.xlu0 %v589
        %v618 = vpop.xlane.xlu0 %617
        %619 = vadd.xlane.f32.xlu0 %v590
        %v620 = vpop.xlane.xlu0 %619
        %621 = vadd.xlane.f32.xlu0 %v591
        %v622 = vpop.xlane.xlu0 %621
        %623 = vadd.xlane.f32.xlu0 %v592
        %v624 = vpop.xlane.xlu0 %623
        %v625 = vmul.f32 %v594, %v544
        %v626 = vmul.f32 %v596, %v544
        %v627 = vmul.f32 %v598, %v544
        %v628 = vmul.f32 %v600, %v544
        %v629 = vmul.f32 %v602, %v544
        %v630 = vmul.f32 %v604, %v544
        %v631 = vmul.f32 %v606, %v544
        %v632 = vmul.f32 %v608, %v544
        %v633 = vmul.f32 %v610, %v544
        %v634 = vmul.f32 %v612, %v544
        %v635 = vmul.f32 %v614, %v544
        %v636 = vmul.f32 %v616, %v544
        %v637 = vmul.f32 %v618, %v544
        %v638 = vmul.f32 %v620, %v544
        %v639 = vmul.f32 %v622, %v544
        %v640 = vmul.f32 %v624, %v544
        %v641 = vadd.f32 %v625, 1e-05
        %v642 = vadd.f32 %v626, 1e-05
        %v643 = vadd.f32 %v627, 1e-05
        %v644 = vadd.f32 %v628, 1e-05
        %v645 = vadd.f32 %v629, 1e-05
        %v646 = vadd.f32 %v630, 1e-05
        %v647 = vadd.f32 %v631, 1e-05
        %v648 = vadd.f32 %v632, 1e-05
        %v649 = vadd.f32 %v633, 1e-05
        %v650 = vadd.f32 %v634, 1e-05
        %v651 = vadd.f32 %v635, 1e-05
        %v652 = vadd.f32 %v636, 1e-05
        %v653 = vadd.f32 %v637, 1e-05
        %v654 = vadd.f32 %v638, 1e-05
        %v655 = vadd.f32 %v639, 1e-05
        %v656 = vadd.f32 %v640, 1e-05
        %v657 = vrsqrt.pop %v641
        %v658 = vrsqrt.pop %v642
        %v659 = vrsqrt.pop %v643
        %v660 = vrsqrt.pop %v644
        %v661 = vrsqrt.pop %v645
        %v662 = vrsqrt.pop %v646
        %v663 = vrsqrt.pop %v647
        %v664 = vrsqrt.pop %v648
        %v665 = vrsqrt.pop %v649
        %v666 = vrsqrt.pop %v650
        %v667 = vrsqrt.pop %v651
        %v668 = vrsqrt.pop %v652
        %v669 = vrsqrt.pop %v653
        %v670 = vrsqrt.pop %v654
        %v671 = vrsqrt.pop %v655
        %v672 = vrsqrt.pop %v656
        %v673 = vmul.f32 %v561, %v657
        %v674 = vmul.f32 %v562, %v658
        %v675 = vmul.f32 %v563, %v659
        %v676 = vmul.f32 %v564, %v660
        %v677 = vmul.f32 %v565, %v661
        %v678 = vmul.f32 %v566, %v662
        %v679 = vmul.f32 %v567, %v663
        %v680 = vmul.f32 %v568, %v664
        %v681 = vmul.f32 %v569, %v665
        %v682 = vmul.f32 %v570, %v666
        %v683 = vmul.f32 %v571, %v667
        %v684 = vmul.f32 %v572, %v668
        %v685 = vmul.f32 %v573, %v669
        %v686 = vmul.f32 %v574, %v670
        %v687 = vmul.f32 %v575, %v671
        %v688 = vmul.f32 %v576, %v672
        %v689 = vld [vmem:[%s3] sm:$0x1]
        %v691 = vlaneseq
        %v692 = vshrl.u32 %v691, 7
        %v693 = vsub.s32 0, %v692
        %v694 = vrot.slane %v689, %v693
        %v696 = vmul.f32 %v673, %v694
        %v697 = vmul.f32 %v674, %v694
        %v698 = vmul.f32 %v675, %v694
        %v699 = vmul.f32 %v676, %v694
        %v700 = vmul.f32 %v677, %v694
        %v701 = vmul.f32 %v678, %v694
        %v702 = vmul.f32 %v679, %v694
        %v703 = vmul.f32 %v680, %v694
        %v704 = vmul.f32 %v681, %v694
        %v705 = vmul.f32 %v682, %v694
        %v706 = vmul.f32 %v683, %v694
        %v707 = vmul.f32 %v684, %v694
        %v708 = vmul.f32 %v685, %v694
        %v709 = vmul.f32 %v686, %v694
        %v710 = vmul.f32 %v687, %v694
        %v711 = vmul.f32 %v688, %v694
        %v712 = vld [vmem:[%s4] sm:$0x1]
        %v714 = vlaneseq
        %v715 = vshrl.u32 %v714, 7
        %v716 = vsub.s32 0, %v715
        %v717 = vrot.slane %v712, %v716
        %v719 = vadd.f32 %v696, %v717
        %v720 = vadd.f32 %v697, %v717
        %v721 = vadd.f32 %v698, %v717
        %v722 = vadd.f32 %v699, %v717
        %v723 = vadd.f32 %v700, %v717
        %v724 = vadd.f32 %v701, %v717
        %v725 = vadd.f32 %v702, %v717
        %v726 = vadd.f32 %v703, %v717
        %v727 = vadd.f32 %v704, %v717
        %v728 = vadd.f32 %v705, %v717
        %v729 = vadd.f32 %v706, %v717
        %v730 = vadd.f32 %v707, %v717
        %v731 = vadd.f32 %v708, %v717
        %v732 = vadd.f32 %v709, %v717
        %v733 = vadd.f32 %v710, %v717
        %v734 = vadd.f32 %v711, %v717
        %v735 = vmax.f32 %v719, 0.0
        %v736 = vmax.f32 %v720, 0.0
        %v737 = vmax.f32 %v721, 0.0
        %v738 = vmax.f32 %v722, 0.0
        %v739 = vmax.f32 %v723, 0.0
        %v740 = vmax.f32 %v724, 0.0
        %v741 = vmax.f32 %v725, 0.0
        %v742 = vmax.f32 %v726, 0.0
        %v743 = vmax.f32 %v727, 0.0
        %v744 = vmax.f32 %v728, 0.0
        %v745 = vmax.f32 %v729, 0.0
        %v746 = vmax.f32 %v730, 0.0
        %v747 = vmax.f32 %v731, 0.0
        %v748 = vmax.f32 %v732, 0.0
        %v749 = vmax.f32 %v733, 0.0
        %v750 = vmax.f32 %v734, 0.0
        %v751 = vld [vmem:[#allocation7] sm:$0xff]
        %v752 = vld [vmem:[#allocation7 + $0x8] sm:$0xff]
        %v753 = vld [vmem:[#allocation7 + $0x10] sm:$0xff]
        %v754 = vld [vmem:[#allocation7 + $0x18] sm:$0xff]
        %v755 = vld [vmem:[#allocation7 + $0x20] sm:$0xff]
        %v756 = vld [vmem:[#allocation7 + $0x28] sm:$0xff]
        %v757 = vld [vmem:[#allocation7 + $0x30] sm:$0xff]
        %v758 = vld [vmem:[#allocation7 + $0x38] sm:$0xff]
        %v759 = vld [vmem:[#allocation7 + $0x40] sm:$0xff]
        %v760 = vld [vmem:[#allocation7 + $0x48] sm:$0xff]
        %v761 = vld [vmem:[#allocation7 + $0x50] sm:$0xff]
        %v762 = vld [vmem:[#allocation7 + $0x58] sm:$0xff]
        %v763 = vld [vmem:[#allocation7 + $0x60] sm:$0xff]
        %v764 = vld [vmem:[#allocation7 + $0x68] sm:$0xff]
        %v765 = vld [vmem:[#allocation7 + $0x70] sm:$0xff]
        %v766 = vld [vmem:[#allocation7 + $0x78] sm:$0xff]
        %v767 = vld [vmem:[%s6] sm:$0x1]
        %v769 = vlaneseq
        %v770 = vshrl.u32 %v769, 7
        %v771 = vsub.s32 0, %v770
        %v772 = vrot.slane %v767, %v771
        %774 = vmatprep.subr.mxu0 0.0
        %775 = vmatpush1.msra.mxu0 %v751
        %776 = vmatprep.subr.mxu0 0.0
        %777 = vmatpush1.msra.mxu0 %v752
        %778 = vmatprep.subr.mxu0 0.0
        %779 = vmatpush1.msra.mxu0 %v753
        %780 = vmatprep.subr.mxu0 0.0
        %781 = vmatpush1.msra.mxu0 %v754
        %782 = vmatprep.subr.mxu0 0.0
        %783 = vmatpush1.msra.mxu0 %v755
        %784 = vmatprep.subr.mxu0 0.0
        %785 = vmatpush1.msra.mxu0 %v756
        %786 = vmatprep.subr.mxu0 0.0
        %787 = vmatpush1.msra.mxu0 %v757
        %788 = vmatprep.subr.mxu0 0.0
        %789 = vmatpush1.msra.mxu0 %v758
        %790 = vmatprep.subr.mxu0 0.0
        %791 = vmatpush1.msra.mxu0 %v759
        %792 = vmatprep.subr.mxu0 0.0
        %793 = vmatpush1.msra.mxu0 %v760
        %794 = vmatprep.subr.mxu0 0.0
        %795 = vmatpush1.msra.mxu0 %v761
        %796 = vmatprep.subr.mxu0 0.0
        %797 = vmatpush1.msra.mxu0 %v762
        %798 = vmatprep.subr.mxu0 0.0
        %799 = vmatpush1.msra.mxu0 %v763
        %800 = vmatprep.subr.mxu0 0.0
        %801 = vmatpush1.msra.mxu0 %v764
        %802 = vmatprep.subr.mxu0 0.0
        %803 = vmatpush1.msra.mxu0 %v765
        %804 = vmatprep.subr.mxu0 0.0
        %805 = vmatpush1.msra.mxu0 %v766
        %806 = vmatprep.subr.mxu0 0.0
        %807 = vmatpush1.msra.mxu0 0.0
        %808 = vmatprep.subr.mxu0 0.0
        %809 = vmatpush1.msra.mxu0 0.0
        %810 = vmatprep.subr.mxu0 0.0
        %811 = vmatpush1.msra.mxu0 0.0
        %812 = vmatprep.subr.mxu0 0.0
        %813 = vmatpush1.msra.mxu0 0.0
        %814 = vmatprep.subr.mxu0 0.0
        %815 = vmatpush1.msra.mxu0 0.0
        %816 = vmatprep.subr.mxu0 0.0
        %817 = vmatpush1.msra.mxu0 0.0
        %818 = vmatprep.subr.mxu0 0.0
        %819 = vmatpush1.msra.mxu0 0.0
        %820 = vmatprep.subr.mxu0 0.0
        %821 = vmatpush1.msra.mxu0 0.0
        %822 = vmatprep.subr.mxu0 0.0
        %823 = vmatpush1.msra.mxu0 0.0
        %824 = vmatprep.subr.mxu0 0.0
        %825 = vmatpush1.msra.mxu0 0.0
        %826 = vmatprep.subr.mxu0 0.0
        %827 = vmatpush1.msra.mxu0 0.0
        %828 = vmatprep.subr.mxu0 0.0
        %829 = vmatpush1.msra.mxu0 0.0
        %830 = vmatprep.subr.mxu0 0.0
        %831 = vmatpush1.msra.mxu0 0.0
        %832 = vmatprep.subr.mxu0 0.0
        %833 = vmatpush1.msra.mxu0 0.0
        %834 = vmatprep.subr.mxu0 0.0
        %835 = vmatpush1.msra.mxu0 0.0
        %836 = vmatprep.subr.mxu0 0.0
        %837 = vmatpush1.msra.mxu0 0.0
        %838 = vmatprep.mubr.f32.mxu0 0.0
        %839 = vmatmul.mubr.f32.gmra.mrb[0].mxu0 %v735
        %v840 = vpop.f32.mrb[0].mxu0
        %v841 = vadd.f32 %v772, %v840
        %v842 = vpop.f32.mrb[0].mxu0
        %843 = vmatprep.mubr.f32.mxu0 0.0
        %844 = vmatmul.mubr.f32.gmra.mrb[0].mxu0 %v736
        %v845 = vpop.f32.mrb[0].mxu0
        %v846 = vadd.f32 %v772, %v845
        %v847 = vpop.f32.mrb[0].mxu0
        %848 = vmatprep.mubr.f32.mxu0 0.0
        %849 = vmatmul.mubr.f32.gmra.mrb[0].mxu0 %v737
        %v850 = vpop.f32.mrb[0].mxu0
        %v851 = vadd.f32 %v772, %v850
        %v852 = vpop.f32.mrb[0].mxu0
        %853 = vmatprep.mubr.f32.mxu0 0.0
        %854 = vmatmul.mubr.f32.gmra.mrb[0].mxu0 %v738
        %v855 = vpop.f32.mrb[0].mxu0
        %v856 = vadd.f32 %v772, %v855
        %v857 = vpop.f32.mrb[0].mxu0
        %858 = vmatprep.mubr.f32.mxu0 0.0
        %859 = vmatmul.mubr.f32.gmra.mrb[0].mxu0 %v739
        %v860 = vpop.f32.mrb[0].mxu0
        %v861 = vadd.f32 %v772, %v860
        %v862 = vpop.f32.mrb[0].mxu0
        %863 = vmatprep.mubr.f32.mxu0 0.0
        %864 = vmatmul.mubr.f32.gmra.mrb[0].mxu0 %v740
        %v865 = vpop.f32.mrb[0].mxu0
        %v866 = vadd.f32 %v772, %v865
        %v867 = vpop.f32.mrb[0].mxu0
        %868 = vmatprep.mubr.f32.mxu0 0.0
        %869 = vmatmul.mubr.f32.gmra.mrb[0].mxu0 %v741
        %v870 = vpop.f32.mrb[0].mxu0
        %v871 = vadd.f32 %v772, %v870
        %v872 = vpop.f32.mrb[0].mxu0
        %873 = vmatprep.mubr.f32.mxu0 0.0
        %874 = vmatmul.mubr.f32.gmra.mrb[0].mxu0 %v742
        %v875 = vpop.f32.mrb[0].mxu0
        %v876 = vadd.f32 %v772, %v875
        %v877 = vpop.f32.mrb[0].mxu0
        %878 = vmatprep.mubr.f32.mxu0 0.0
        %879 = vmatmul.mubr.f32.gmra.mrb[0].mxu0 %v743
        %v880 = vpop.f32.mrb[0].mxu0
        %v881 = vadd.f32 %v772, %v880
        %v882 = vpop.f32.mrb[0].mxu0
        %883 = vmatprep.mubr.f32.mxu0 0.0
        %884 = vmatmul.mubr.f32.gmra.mrb[0].mxu0 %v744
        %v885 = vpop.f32.mrb[0].mxu0
        %v886 = vadd.f32 %v772, %v885
        %v887 = vpop.f32.mrb[0].mxu0
        %888 = vmatprep.mubr.f32.mxu0 0.0
        %889 = vmatmul.mubr.f32.gmra.mrb[0].mxu0 %v745
        %v890 = vpop.f32.mrb[0].mxu0
        %v891 = vadd.f32 %v772, %v890
        %v892 = vpop.f32.mrb[0].mxu0
        %893 = vmatprep.mubr.f32.mxu0 0.0
        %894 = vmatmul.mubr.f32.gmra.mrb[0].mxu0 %v746
        %v895 = vpop.f32.mrb[0].mxu0
        %v896 = vadd.f32 %v772, %v895
        %v897 = vpop.f32.mrb[0].mxu0
        %898 = vmatprep.mubr.f32.mxu0 0.0
        %899 = vmatmul.mubr.f32.gmra.mrb[0].mxu0 %v747
        %v900 = vpop.f32.mrb[0].mxu0
        %v901 = vadd.f32 %v772, %v900
        %v902 = vpop.f32.mrb[0].mxu0
        %903 = vmatprep.mubr.f32.mxu0 0.0
        %904 = vmatmul.mubr.f32.gmra.mrb[0].mxu0 %v748
        %v905 = vpop.f32.mrb[0].mxu0
        %v906 = vadd.f32 %v772, %v905
        %v907 = vpop.f32.mrb[0].mxu0
        %908 = vmatprep.mubr.f32.mxu0 0.0
        %909 = vmatmul.mubr.f32.gmra.mrb[0].mxu0 %v749
        %v910 = vpop.f32.mrb[0].mxu0
        %v911 = vadd.f32 %v772, %v910
        %v912 = vpop.f32.mrb[0].mxu0
        %913 = vmatprep.mubr.f32.mxu0 0.0
        %914 = vmatmul.mubr.f32.gmra.mrb[0].mxu0 %v750
        %v915 = vpop.f32.mrb[0].mxu0
        %v916 = vadd.f32 %v772, %v915
        %v917 = vpop.f32.mrb[0].mxu0
        %918 = vdwg.mxu0
        %v919 = vmul.f32 %v841, %v841
        %v920 = vmul.f32 %v846, %v846
        %v921 = vmul.f32 %v851, %v851
        %v922 = vmul.f32 %v856, %v856
        %v923 = vmul.f32 %v861, %v861
        %v924 = vmul.f32 %v866, %v866
        %v925 = vmul.f32 %v871, %v871
        %v926 = vmul.f32 %v876, %v876
        %v927 = vmul.f32 %v881, %v881
        %v928 = vmul.f32 %v886, %v886
        %v929 = vmul.f32 %v891, %v891
        %v930 = vmul.f32 %v896, %v896
        %v931 = vmul.f32 %v901, %v901
        %v932 = vmul.f32 %v906, %v906
        %v933 = vmul.f32 %v911, %v911
        %v934 = vmul.f32 %v916, %v916
        %935 = vadd.xlane.f32.xlu0 %v919
        %v936 = vpop.xlane.xlu0 %935
        %937 = vadd.xlane.f32.xlu0 %v920
        %v938 = vpop.xlane.xlu0 %937
        %939 = vadd.xlane.f32.xlu0 %v921
        %v940 = vpop.xlane.xlu0 %939
        %941 = vadd.xlane.f32.xlu0 %v922
        %v942 = vpop.xlane.xlu0 %941
        %943 = vadd.xlane.f32.xlu0 %v923
        %v944 = vpop.xlane.xlu0 %943
        %945 = vadd.xlane.f32.xlu0 %v924
        %v946 = vpop.xlane.xlu0 %945
        %947 = vadd.xlane.f32.xlu0 %v925
        %v948 = vpop.xlane.xlu0 %947
        %949 = vadd.xlane.f32.xlu0 %v926
        %v950 = vpop.xlane.xlu0 %949
        %951 = vadd.xlane.f32.xlu0 %v927
        %v952 = vpop.xlane.xlu0 %951
        %953 = vadd.xlane.f32.xlu0 %v928
        %v954 = vpop.xlane.xlu0 %953
        %955 = vadd.xlane.f32.xlu0 %v929
        %v956 = vpop.xlane.xlu0 %955
        %957 = vadd.xlane.f32.xlu0 %v930
        %v958 = vpop.xlane.xlu0 %957
        %959 = vadd.xlane.f32.xlu0 %v931
        %v960 = vpop.xlane.xlu0 %959
        %961 = vadd.xlane.f32.xlu0 %v932
        %v962 = vpop.xlane.xlu0 %961
        %963 = vadd.xlane.f32.xlu0 %v933
        %v964 = vpop.xlane.xlu0 %963
        %965 = vadd.xlane.f32.xlu0 %v934
        %v966 = vpop.xlane.xlu0 %965
        %v967 = vmax.f32 %v936, 1e-24
        %v968 = vmax.f32 %v938, 1e-24
        %v969 = vmax.f32 %v940, 1e-24
        %v970 = vmax.f32 %v942, 1e-24
        %v971 = vmax.f32 %v944, 1e-24
        %v972 = vmax.f32 %v946, 1e-24
        %v973 = vmax.f32 %v948, 1e-24
        %v974 = vmax.f32 %v950, 1e-24
        %v975 = vmax.f32 %v952, 1e-24
        %v976 = vmax.f32 %v954, 1e-24
        %v977 = vmax.f32 %v956, 1e-24
        %v978 = vmax.f32 %v958, 1e-24
        %v979 = vmax.f32 %v960, 1e-24
        %v980 = vmax.f32 %v962, 1e-24
        %v981 = vmax.f32 %v964, 1e-24
        %v982 = vmax.f32 %v966, 1e-24
        %v983 = vrsqrt.pop %v967
        %v984 = vrsqrt.pop %v968
        %v985 = vrsqrt.pop %v969
        %v986 = vrsqrt.pop %v970
        %v987 = vrsqrt.pop %v971
        %v988 = vrsqrt.pop %v972
        %v989 = vrsqrt.pop %v973
        %v990 = vrsqrt.pop %v974
        %v991 = vrsqrt.pop %v975
        %v992 = vrsqrt.pop %v976
        %v993 = vrsqrt.pop %v977
        %v994 = vrsqrt.pop %v978
        %v995 = vrsqrt.pop %v979
        %v996 = vrsqrt.pop %v980
        %v997 = vrsqrt.pop %v981
        %v998 = vrsqrt.pop %v982
        %v999 = vmul.f32 %v841, %v983
        %v1000 = vmul.f32 %v846, %v984
        %v1001 = vmul.f32 %v851, %v985
        %v1002 = vmul.f32 %v856, %v986
        %v1003 = vmul.f32 %v861, %v987
        %v1004 = vmul.f32 %v866, %v988
        %v1005 = vmul.f32 %v871, %v989
        %v1006 = vmul.f32 %v876, %v990
        %v1007 = vmul.f32 %v881, %v991
        %v1008 = vmul.f32 %v886, %v992
        %v1009 = vmul.f32 %v891, %v993
        %v1010 = vmul.f32 %v896, %v994
        %v1011 = vmul.f32 %v901, %v995
        %v1012 = vmul.f32 %v906, %v996
        %v1013 = vmul.f32 %v911, %v997
        %v1014 = vmul.f32 %v916, %v998
        %1015 = vst [vmem:[%s325] sm:$0xff] %v999
        %1016 = vst [vmem:[%s325 + $0x8] sm:$0xff] %v1000
        %1017 = vst [vmem:[%s325 + $0x10] sm:$0xff] %v1001
        %1018 = vst [vmem:[%s325 + $0x18] sm:$0xff] %v1002
        %1019 = vst [vmem:[%s325 + $0x20] sm:$0xff] %v1003
        %1020 = vst [vmem:[%s325 + $0x28] sm:$0xff] %v1004
        %1021 = vst [vmem:[%s325 + $0x30] sm:$0xff] %v1005
        %1022 = vst [vmem:[%s325 + $0x38] sm:$0xff] %v1006
        %1023 = vst [vmem:[%s325 + $0x40] sm:$0xff] %v1007
        %1024 = vst [vmem:[%s325 + $0x48] sm:$0xff] %v1008
        %1025 = vst [vmem:[%s325 + $0x50] sm:$0xff] %v1009
        %1026 = vst [vmem:[%s325 + $0x58] sm:$0xff] %v1010
        %1027 = vst [vmem:[%s325 + $0x60] sm:$0xff] %v1011
        %1028 = vst [vmem:[%s325 + $0x68] sm:$0xff] %v1012
        %1029 = vst [vmem:[%s325 + $0x70] sm:$0xff] %v1013
        %1030 = vst [vmem:[%s325 + $0x78] sm:$0xff] %v1014
        %s1031 = sand.u32 %s185, 1
        %s1032 = scalar_lea.sflag [#allocation4], %s1031
        %s1033 = sand.u32 %s185, 1
        %s1034 = smul.addr %s1033, 128
        %s1035 = scalar_lea.vmem [#allocation8], %s1034
        // Predicated region
        $region61: #{tpu_custom_call.1} parent=47 // pred_check
          %p1036 = pneg %p195
        $region62: #{tpu_custom_call.1} parent=47 // pred_check_branch
          %1038 = sbr.rel (%p1036) target = $region64
        $region63: #{tpu_custom_call.1} parent=47 // pred_region
          %s1039 = smul.u32 16, %s25
          %s1041 = ssub.s32 2048, 2048
          %1042 = vsyncadd %s1032, %s1041
          %s1043 = smul.addr %s1039, 128
          %s1044 = scalar_lea.hbm %s7, %s1043
          %s1045 = sshll.u32 %s1035, 4
          %s1046 = int_to_ptr.vmem [resolvable:$true] %s1045
          %1051 = dma.vmem_to_hbm [thread:$0]  %s1046, 2048, %s1044, %s1032, 128, 128, 8
        $region64: #{tpu_custom_call.1} parent=47 // pred_fallthru
          _
      $region48: #{tpu_custom_call.1} parent=5 // pred_fallthru
        _
      %p1052 = scmp.le.s32.totalorder 2, %s20
      // Predicated region
      $region65: #{tpu_custom_call.1} parent=5 // pred_check
        %p1053 = pneg %p1052
      $region66: #{tpu_custom_call.1} parent=5 // pred_check_branch
        %1055 = sbr.rel (%p1053) target = $region68
      $region67: #{tpu_custom_call.1} parent=5 // pred_region
        %s1056 = ssub.s32 %s20, 2
        // Predicated region
        $region69: #{tpu_custom_call.1} parent=67 // pred_check
          %p1057 = pneg %p201
        $region70: #{tpu_custom_call.1} parent=67 // pred_check_branch
          %1059 = sbr.rel (%p1057) target = $region72
        $region71: #{tpu_custom_call.1} parent=67 // pred_region
          %s1060 = sand.u32 %s186, 1
          %s1061 = scalar_lea.sflag [#allocation4], %s1060
          %s1062 = sand.u32 %s186, 1
          %s1063 = smul.addr %s1062, 128
          %s1064 = scalar_lea.vmem [#allocation8], %s1063
          %1065 = dma.done %s1061, 2048
        $region72: #{tpu_custom_call.1} parent=67 // pred_fallthru
          _
      $region68: #{tpu_custom_call.1} parent=5 // pred_fallthru
        _
    $region6: #{tpu_custom_call.1} parent=1 // loop_footer
      %s24 = sadd.s32 1, %s20
    $region7: #{tpu_custom_call.1} parent=1 // loop_footer_branch
      %19 = sbr.rel target = $region3
    $region8: #{tpu_custom_call.1} parent=1 // loop_exit
      _
    %1066 = vsyncpa [#allocation3], 1
    %s1067 = scalar_lea.sflag [#allocation3], 1
    %1068 = vsyncpa %s1067, 1
    %1069 = vsyncpa [#allocation6], 1
    %1070 = vsyncpa [#allocation4], 1
    %s1071 = scalar_lea.sflag [#allocation4], 1
    %1072 = vsyncpa %s1071, 1

</llo_original>
